<compile_context>
chip_gen: v7x
topology: tpu7x:2x2x1
jax: 0.10.0
libtpu: 0.0.40
codegen_flags: <defaults>
</compile_context>

<pallas_src>
import functools
import math

import jax
import jax.numpy as jnp
import numpy as np
from jax.experimental import pallas as pl
from jax.experimental.pallas import tpu as pltpu


def _round_up(v, m):
    return ((v + m - 1) // m) * m


def _equal_conv1d_kernel(x_ref, w_ref, b_ref, o_ref, rhs_ref, *,
                         pad, ksize, l_in, l_out, l_seg, bt):
    """One batch block (Bt elements) per grid step.

    x_ref  : (Bt, Cin, L)       activation block (NCL layout, L lane-dense)
    w_ref  : (Cout, K*Cin)      EqualLR-scaled weight, im2col layout
    b_ref  : (Cout, 1)          bias (f32)
    o_ref  : (Bt, Cout, Lout)   output block
    rhs_ref: (K*Cin, Bt*Lseg)   VMEM scratch: stacked im2col RHS
    """
    cin = x_ref.shape[1]
    zdt = rhs_ref.dtype

    # ---- im2col build: fused zero padding + tap/batch stacking -------------
    # RHS[k*Cin + ci, b*Lseg + t] = x[b, ci, t + k - pad]   (0 outside [0, L))
    for b in range(bt):                        # static unroll (Bt is modest)
        base = b * l_seg
        for k in range(ksize):
            row = k * cin
            t_lo = min(max(0, pad - k), l_out)            # first valid col
            t_hi = max(t_lo, min(l_out, l_in + pad - k))   # one past last valid
            if t_lo > 0:                                   # left zero strip
                rhs_ref[row:row + cin, base:base + t_lo] = jnp.zeros(
                    (cin, t_lo), zdt)
            if t_hi < l_seg:                               # right zeros + lane pad
                rhs_ref[row:row + cin, base + t_hi:base + l_seg] = jnp.zeros(
                    (cin, l_seg - t_hi), zdt)
            if t_hi > t_lo:                                # valid window copy
                src_lo = t_lo + k - pad
                rhs_ref[row:row + cin, base + t_lo:base + t_hi] = (
                    x_ref[b, :, src_lo:src_lo + (t_hi - t_lo)])

    # ---- one MXU matmul for the whole batch block, f32 accumulation --------
    out = jnp.dot(w_ref[...], rhs_ref[...],
                  preferred_element_type=jnp.float32)      # (Cout, Bt*Lseg)
    out = out + b_ref[...]

    # ---- lane-dense (128-aligned) stores back into NCL layout --------------
    for b in range(bt):
        o_ref[b] = out[:, b * l_seg:b * l_seg + l_out].astype(o_ref.dtype)


def equal_conv1d(x, weight, bias, *, padding=1, stride=1, dilation=1,
                 batch_block=32, compute_dtype=None):
    """EqualConv1d forward.

    x: (N, Cin, L); weight: (Cout, Cin, K); bias: (Cout,).
    compute_dtype: dtype of the MXU operands (weight + im2col RHS + activation
    DMA). Pass jnp.bfloat16 on v6e/v7x for higher MXU throughput and half the
    activation HBM bytes; accumulation / bias / output stay f32.
    """
    assert stride == 1 and dilation == 1, (
        "EqualConv1d Pallas kernel only implements stride=1, dilation=1 "
        "(the module's configuration)")
    N, Cin, L = x.shape
    Cout, Cin_w, K = weight.shape
    assert Cin == Cin_w
    assert padding >= 0 and K >= 1

    out_dtype = x.dtype
    if compute_dtype is None:
        compute_dtype = x.dtype

    fan_in = Cin * K                      # EqualLR: size(1) * weight[0][0].numel()
    scale = math.sqrt(2.0 / fan_in)
    l_out = L + 2 * padding - K + 1
    assert l_out >= 1
    l_seg = _round_up(l_out, 128)         # lane-aligned per-batch RHS segment

    # Fold the EqualLR scale into the (tiny) weight once at trace time and lay
    # it out as (Cout, K*Cin) so the whole conv becomes one im2col matmul LHS.
    w2d = (jnp.transpose(weight, (0, 2, 1)).reshape(Cout, K * Cin)
           * scale).astype(compute_dtype)
    b2d = bias.reshape(Cout, 1).astype(jnp.float32)

    # Cast activations at the call boundary (halves HBM->VMEM bytes for bf16).
    x_in = x.astype(compute_dtype)

    # Batch blocking: Bt elements per grid step; pad N up to a multiple of Bt.
    bt = max(1, min(batch_block, N))
    n_pad = (-N) % bt
    if n_pad:
        x_in = jnp.pad(x_in, ((0, n_pad), (0, 0), (0, 0)))
    n_total = N + n_pad
    grid = (n_total // bt,)

    kernel = functools.partial(_equal_conv1d_kernel, pad=padding, ksize=K,
                               l_in=L, l_out=l_out, l_seg=l_seg, bt=bt)

    grid_spec = pltpu.PrefetchScalarGridSpec(
        num_scalar_prefetch=0,
        grid=grid,
        in_specs=[
            pl.BlockSpec((bt, Cin, L), lambda n: (n, 0, 0)),    # x (batch block)
            pl.BlockSpec((Cout, K * Cin), lambda n: (0, 0)),    # weight (reused)
            pl.BlockSpec((Cout, 1), lambda n: (0, 0)),          # bias   (reused)
        ],
        out_specs=pl.BlockSpec((bt, Cout, l_out), lambda n: (n, 0, 0)),
        scratch_shapes=[pltpu.VMEM((K * Cin, bt * l_seg), compute_dtype)],
    )

    cost = pl.CostEstimate(
        flops=2 * n_total * Cout * Cin * K * l_out,
        transcendentals=0,
        bytes_accessed=int(x_in.size * np.dtype(x_in.dtype).itemsize
                           + w2d.size * np.dtype(w2d.dtype).itemsize
                           + b2d.size * 4
                           + n_total * Cout * l_out
                           * np.dtype(out_dtype).itemsize),
    )

    out = pl.pallas_call(
        kernel,
        out_shape=jax.ShapeDtypeStruct((n_total, Cout, l_out), out_dtype),
        grid_spec=grid_spec,
        compiler_params=pltpu.CompilerParams(
            dimension_semantics=("parallel",)),
        cost_estimate=cost,
    )(x_in, w2d, b2d)

    return out[:N] if n_pad else out


if __name__ == "__main__":
    key = jax.random.PRNGKey(0)
    k_x, k_w = jax.random.split(key)

    # Shapes consistent with the module (its test input is torch.randn(1, 16, 128)):
    # EqualConv1d(16, 32, kernel_size=3, padding=1), batch=2.
    N, Cin, L = 2, 16, 128
    Cout, K, pad = 32, 3, 1

    x = jax.random.normal(k_x, (N, Cin, L), dtype=jnp.float32)
    # conv.weight.data.normal_() ; conv.bias.data.zero_()
    weight = jax.random.normal(k_w, (Cout, Cin, K), dtype=jnp.float32)
    bias = jnp.zeros((Cout,), dtype=jnp.float32)

    # Reference: XLA 1D conv with the EqualLR-scaled weight.
    scale = math.sqrt(2.0 / (Cin * K))
    ref = jax.lax.conv_general_dilated(
        x, weight * scale, window_strides=(1,), padding=((pad, pad),),
        dimension_numbers=("NCH", "OIH", "NCH")) + bias[None, :, None]

    # f32 MXU operands (matches the f32 PyTorch module closely).
    out = jax.block_until_ready(equal_conv1d(x, weight, bias, padding=pad))
    assert out.shape == (N, Cout, L)
    np.testing.assert_allclose(np.asarray(out), np.asarray(ref),
                               rtol=1e-4, atol=1e-4)

    # bf16 MXU-operand fast path (v6e/v7x), f32 accumulation -> looser tolerance.
    out_bf16 = jax.block_until_ready(
        equal_conv1d(x, weight, bias, padding=pad, compute_dtype=jnp.bfloat16))
    np.testing.assert_allclose(np.asarray(out_bf16), np.asarray(ref),
                               rtol=5e-2, atol=5e-2)

    print("KERNEL_OK")
</pallas_src>

<mosaic_0001>
module attributes {stable_mosaic.version = 11 : i64} {
  func.func @_equal_conv1d_kernel(%arg0: i32, %arg1: memref<2x16x128xf32, #tpu.memory_space<vmem>>, %arg2: memref<32x48xf32, #tpu.memory_space<vmem>>, %arg3: memref<32x1xf32, #tpu.memory_space<vmem>>, %arg4: memref<2x32x128xf32, #tpu.memory_space<vmem>>, %arg5: memref<48x256xf32, #tpu.memory_space<vmem>>) attributes {dimension_semantics = [#tpu.dimension_semantics<parallel>], iteration_bounds = array<i64: 1>, scalar_prefetch = 0 : i64, scratch_operands = 1 : i64, tpu.core_type = #tpu.core_type<tc>, window_params = [{transform_indices = @transform_0, window_bounds = array<i64: 2, 16, 128>}, {pipeline_mode = #tpu.pipeline_mode<synchronous>, transform_indices = @transform_1, window_bounds = array<i64: 32, 48>}, {pipeline_mode = #tpu.pipeline_mode<synchronous>, transform_indices = @transform_2, window_bounds = array<i64: 32, 1>}, {transform_indices = @transform_3, window_bounds = array<i64: 2, 32, 128>}]} {
    %cst = arith.constant 0.000000e+00 : f32
    %0 = vector.broadcast %cst : f32 to vector<16x1xf32>
    %c0 = arith.constant 0 : index
    %c0_0 = arith.constant 0 : index
    %1 = vector.load %arg5[%c0, %c0_0] : memref<48x256xf32, #tpu.memory_space<vmem>>, vector<16x1xf32>
    tpu.vector_store %arg5[%c0, %c0_0], %0 {strides = array<i32>} : memref<48x256xf32, #tpu.memory_space<vmem>>, vector<16x1xf32>,
    %c0_1 = arith.constant 0 : index
    %c0_2 = arith.constant 0 : index
    %c0_3 = arith.constant 0 : index
    %2 = vector.load %arg1[%c0_1, %c0_2, %c0_3] : memref<2x16x128xf32, #tpu.memory_space<vmem>>, vector<1x16x127xf32>
    %3 = vector.shape_cast %2 : vector<1x16x127xf32> to vector<16x127xf32>
    %c0_4 = arith.constant 0 : index
    %c1 = arith.constant 1 : index
    %4 = vector.load %arg5[%c0_4, %c1] : memref<48x256xf32, #tpu.memory_space<vmem>>, vector<16x127xf32>
    tpu.vector_store %arg5[%c0_4, %c1], %3 {strides = array<i32>} : memref<48x256xf32, #tpu.memory_space<vmem>>, vector<16x127xf32>,
    %c0_5 = arith.constant 0 : index
    %c0_6 = arith.constant 0 : index
    %c0_7 = arith.constant 0 : index
    %5 = vector.load %arg1[%c0_5, %c0_6, %c0_7] : memref<2x16x128xf32, #tpu.memory_space<vmem>>, vector<1x16x128xf32>
    %6 = vector.shape_cast %5 : vector<1x16x128xf32> to vector<16x128xf32>
    %c16 = arith.constant 16 : index
    %c0_8 = arith.constant 0 : index
    %7 = vector.load %arg5[%c16, %c0_8] : memref<48x256xf32, #tpu.memory_space<vmem>>, vector<16x128xf32>
    tpu.vector_store %arg5[%c16, %c0_8], %6 {strides = array<i32>} : memref<48x256xf32, #tpu.memory_space<vmem>>, vector<16x128xf32>,
    %cst_9 = arith.constant 0.000000e+00 : f32
    %8 = vector.broadcast %cst_9 : f32 to vector<16x1xf32>
    %c32 = arith.constant 32 : index
    %c127 = arith.constant 127 : index
    %9 = vector.load %arg5[%c32, %c127] : memref<48x256xf32, #tpu.memory_space<vmem>>, vector<16x1xf32>
    tpu.vector_store %arg5[%c32, %c127], %8 {strides = array<i32>} : memref<48x256xf32, #tpu.memory_space<vmem>>, vector<16x1xf32>,
    %c0_10 = arith.constant 0 : index
    %c0_11 = arith.constant 0 : index
    %c1_12 = arith.constant 1 : index
    %10 = vector.load %arg1[%c0_10, %c0_11, %c1_12] : memref<2x16x128xf32, #tpu.memory_space<vmem>>, vector<1x16x127xf32>
    %11 = vector.shape_cast %10 : vector<1x16x127xf32> to vector<16x127xf32>
    %c32_13 = arith.constant 32 : index
    %c0_14 = arith.constant 0 : index
    %12 = vector.load %arg5[%c32_13, %c0_14] : memref<48x256xf32, #tpu.memory_space<vmem>>, vector<16x127xf32>
    tpu.vector_store %arg5[%c32_13, %c0_14], %11 {strides = array<i32>} : memref<48x256xf32, #tpu.memory_space<vmem>>, vector<16x127xf32>,
    %cst_15 = arith.constant 0.000000e+00 : f32
    %13 = vector.broadcast %cst_15 : f32 to vector<16x1xf32>
    %c0_16 = arith.constant 0 : index
    %c128 = arith.constant 128 : index
    %14 = vector.load %arg5[%c0_16, %c128] : memref<48x256xf32, #tpu.memory_space<vmem>>, vector<16x1xf32>
    tpu.vector_store %arg5[%c0_16, %c128], %13 {strides = array<i32>} : memref<48x256xf32, #tpu.memory_space<vmem>>, vector<16x1xf32>,
    %c1_17 = arith.constant 1 : index
    %c0_18 = arith.constant 0 : index
    %c0_19 = arith.constant 0 : index
    %15 = vector.load %arg1[%c1_17, %c0_18, %c0_19] : memref<2x16x128xf32, #tpu.memory_space<vmem>>, vector<1x16x127xf32>
    %16 = vector.shape_cast %15 : vector<1x16x127xf32> to vector<16x127xf32>
    %c0_20 = arith.constant 0 : index
    %c129 = arith.constant 129 : index
    %17 = vector.load %arg5[%c0_20, %c129] : memref<48x256xf32, #tpu.memory_space<vmem>>, vector<16x127xf32>
    tpu.vector_store %arg5[%c0_20, %c129], %16 {strides = array<i32>} : memref<48x256xf32, #tpu.memory_space<vmem>>, vector<16x127xf32>,
    %c1_21 = arith.constant 1 : index
    %c0_22 = arith.constant 0 : index
    %c0_23 = arith.constant 0 : index
    %18 = vector.load %arg1[%c1_21, %c0_22, %c0_23] : memref<2x16x128xf32, #tpu.memory_space<vmem>>, vector<1x16x128xf32>
    %19 = vector.shape_cast %18 : vector<1x16x128xf32> to vector<16x128xf32>
    %c16_24 = arith.constant 16 : index
    %c128_25 = arith.constant 128 : index
    %20 = vector.load %arg5[%c16_24, %c128_25] : memref<48x256xf32, #tpu.memory_space<vmem>>, vector<16x128xf32>
    tpu.vector_store %arg5[%c16_24, %c128_25], %19 {strides = array<i32>} : memref<48x256xf32, #tpu.memory_space<vmem>>, vector<16x128xf32>,
    %cst_26 = arith.constant 0.000000e+00 : f32
    %21 = vector.broadcast %cst_26 : f32 to vector<16x1xf32>
    %c32_27 = arith.constant 32 : index
    %c255 = arith.constant 255 : index
    %22 = vector.load %arg5[%c32_27, %c255] : memref<48x256xf32, #tpu.memory_space<vmem>>, vector<16x1xf32>
    tpu.vector_store %arg5[%c32_27, %c255], %21 {strides = array<i32>} : memref<48x256xf32, #tpu.memory_space<vmem>>, vector<16x1xf32>,
    %c1_28 = arith.constant 1 : index
    %c0_29 = arith.constant 0 : index
    %c1_30 = arith.constant 1 : index
    %23 = vector.load %arg1[%c1_28, %c0_29, %c1_30] : memref<2x16x128xf32, #tpu.memory_space<vmem>>, vector<1x16x127xf32>
    %24 = vector.shape_cast %23 : vector<1x16x127xf32> to vector<16x127xf32>
    %c32_31 = arith.constant 32 : index
    %c128_32 = arith.constant 128 : index
    %25 = vector.load %arg5[%c32_31, %c128_32] : memref<48x256xf32, #tpu.memory_space<vmem>>, vector<16x127xf32>
    tpu.vector_store %arg5[%c32_31, %c128_32], %24 {strides = array<i32>} : memref<48x256xf32, #tpu.memory_space<vmem>>, vector<16x127xf32>,
    %c0_33 = arith.constant 0 : index
    %c0_34 = arith.constant 0 : index
    %26 = vector.load %arg2[%c0_33, %c0_34] : memref<32x48xf32, #tpu.memory_space<vmem>>, vector<32x48xf32>
    %c0_35 = arith.constant 0 : index
    %c0_36 = arith.constant 0 : index
    %27 = vector.load %arg5[%c0_35, %c0_36] : memref<48x256xf32, #tpu.memory_space<vmem>>, vector<48x256xf32>
    %cst_37 = arith.constant dense<0.000000e+00> : vector<32x256xf32>
    %28 = tpu.matmul %26, %27, %cst_37 {dimension_numbers = #tpu.dot_dimension_numbers<[1], [0], [0], [1], [0, 0, 1, 1], [], []>} : vector<32x48xf32>, vector<48x256xf32>, vector<32x256xf32> -> vector<32x256xf32>
    %c0_38 = arith.constant 0 : index
    %c0_39 = arith.constant 0 : index
    %29 = vector.load %arg3[%c0_38, %c0_39] : memref<32x1xf32, #tpu.memory_space<vmem>>, vector<32x1xf32>
    %30 = vector.broadcast %29 : vector<32x1xf32> to vector<32x256xf32>
    %31 = arith.addf %28, %30 : vector<32x256xf32>
    %32 = vector.extract_strided_slice %31 {offsets = [0, 0], sizes = [32, 128], strides = [1, 1]} : vector<32x256xf32> to vector<32x128xf32>
    %c0_40 = arith.constant 0 : index
    %c0_41 = arith.constant 0 : index
    %c0_42 = arith.constant 0 : index
    %33 = vector.load %arg4[%c0_40, %c0_41, %c0_42] : memref<2x32x128xf32, #tpu.memory_space<vmem>>, vector<1x32x128xf32>
    %34 = vector.shape_cast %33 : vector<1x32x128xf32> to vector<32x128xf32>
    %35 = vector.shape_cast %32 : vector<32x128xf32> to vector<1x32x128xf32>
    tpu.vector_store %arg4[%c0_40, %c0_41, %c0_42], %35 {strides = array<i32>} : memref<2x32x128xf32, #tpu.memory_space<vmem>>, vector<1x32x128xf32>,
    %36 = vector.extract_strided_slice %31 {offsets = [0, 128], sizes = [32, 128], strides = [1, 1]} : vector<32x256xf32> to vector<32x128xf32>
    %c1_43 = arith.constant 1 : index
    %c0_44 = arith.constant 0 : index
    %c0_45 = arith.constant 0 : index
    %37 = vector.load %arg4[%c1_43, %c0_44, %c0_45] : memref<2x32x128xf32, #tpu.memory_space<vmem>>, vector<1x32x128xf32>
    %38 = vector.shape_cast %37 : vector<1x32x128xf32> to vector<32x128xf32>
    %39 = vector.shape_cast %36 : vector<32x128xf32> to vector<1x32x128xf32>
    tpu.vector_store %arg4[%c1_43, %c0_44, %c0_45], %39 {strides = array<i32>} : memref<2x32x128xf32, #tpu.memory_space<vmem>>, vector<1x32x128xf32>,
    return
  }
  func.func @transform_0(%arg0: i32) -> (i32, i32, i32) {
    %c0_i32 = arith.constant 0 : i32
    %c0_i32_0 = arith.constant 0 : i32
    %c0_i32_1 = arith.constant 0 : i32
    return %arg0, %c0_i32, %c0_i32_0 : i32, i32, i32
  }
  func.func @transform_1(%arg0: i32) -> (i32, i32) {
    %c0_i32 = arith.constant 0 : i32
    %c0_i32_0 = arith.constant 0 : i32
    %c0_i32_1 = arith.constant 0 : i32
    return %c0_i32, %c0_i32_0 : i32, i32
  }
  func.func @transform_2(%arg0: i32) -> (i32, i32) {
    %c0_i32 = arith.constant 0 : i32
    %c0_i32_0 = arith.constant 0 : i32
    %c0_i32_1 = arith.constant 0 : i32
    return %c0_i32, %c0_i32_0 : i32, i32
  }
  func.func @transform_3(%arg0: i32) -> (i32, i32, i32) {
    %c0_i32 = arith.constant 0 : i32
    %c0_i32_0 = arith.constant 0 : i32
    %c0_i32_1 = arith.constant 0 : i32
    return %arg0, %c0_i32, %c0_i32_0 : i32, i32, i32
  }
}

</mosaic_0001>

<llo_original>
// kernel: tpu_custom_call.1
$region0: #{tpu_custom_call.1}
  #allocation0 [shape = 'u32[]', space=smem, size = 0x4, offset = 0x4, fixed_abs, tag = 'smem constant byte address 0x4 - core index']
  #allocation1 [shape = 'u32[144,128]{1,0:T(1,128)}', space=vmem, size = 0x12000, scoped, tag = 'internal scratch']
  #allocation2 [shape = 'f32[48,256]{1,0:T(8,128)}', space=vmem, size = 0xc000, scoped, tag = 'scratch operand']
  %s0 = inlined_call_operand.vmem [shape: f32[2,16,128], index: 0, kind: input, shape index: {}]
  %s1 = inlined_call_operand.hbm [shape: f32[32,48], index: 1, kind: input, shape index: {}]
  %s2 = inlined_call_operand.vmem [shape: f32[32,1], index: 2, kind: input, shape index: {}]
  %s3 = inlined_call_operand.hbm [shape: f32[2,32,128], index: 3, kind: output, shape index: {}]
  %s4 = sld [smem:[#allocation0]]
  $region26: #{tpu_custom_call.1} parent=0
    _
  %s6 = ssub.s32 1, %s4
  %s7 = scalar_select 0, %s6, %s4
  $region1: #{tpu_custom_call.1} parent=0
    #allocation3 [shape = 'u8[16384]{0}', space=vmem, size = 0x4000, scoped, tag = 'input window, operand 1, single buffered']
    #allocation4 [shape = 's32[1]{0}', space=sflag, size = 0x4, scoped, tag = 'scoped memory for tpu_custom_call.1']
    #allocation5 [shape = 's32[1]{0}', space=sflag, size = 0x4, scoped, tag = 'scoped memory for tpu_custom_call.1']
    #allocation6 [shape = 'u8[32768]{0}', space=vmem, size = 0x8000, scoped, tag = 'output window, operand 0, single buffered']
    %8 = vsyncpa [#allocation4], 0
    %9 = vsyncpa [#allocation5], 0
    // Predicated region
    $region2: #{tpu_custom_call.1} parent=1 // pred_check
      _
    $region3: #{tpu_custom_call.1} parent=1 // pred_check_branch
      %11 = sbr.rel (0) target = $region5
    $region4: #{tpu_custom_call.1} parent=1 // pred_region
      _
    $region5: #{tpu_custom_call.1} parent=1 // pred_fallthru
      _
    // Predicated region
    $region6: #{tpu_custom_call.1} parent=1 // pred_check
      _
    $region7: #{tpu_custom_call.1} parent=1 // pred_check_branch
      %13 = sbr.rel (0) target = $region9
    $region8: #{tpu_custom_call.1} parent=1 // pred_region
      %s15 = ssub.s32 512, 512
      %16 = vsyncadd [#allocation4], %s15
      %s17 = sshll.u32 [#allocation3], 4
      %s18 = int_to_ptr.vmem [resolvable:$true] %s17
      %23 = dma.hbm_to_vmem [thread:$0]  %s1, 512, %s18, [#allocation4], 128, 128, 8
    $region9: #{tpu_custom_call.1} parent=1 // pred_fallthru
      _
    // Predicated region
    $region10: #{tpu_custom_call.1} parent=1 // pred_check
      _
    $region11: #{tpu_custom_call.1} parent=1 // pred_check_branch
      %25 = sbr.rel (0) target = $region13
    $region12: #{tpu_custom_call.1} parent=1 // pred_region
      _
    $region13: #{tpu_custom_call.1} parent=1 // pred_fallthru
      _
    // Predicated region
    $region14: #{tpu_custom_call.1} parent=1 // pred_check
      _
    $region15: #{tpu_custom_call.1} parent=1 // pred_check_branch
      %27 = sbr.rel (0) target = $region17
    $region16: #{tpu_custom_call.1} parent=1 // pred_region
      %28 = dma.done [#allocation4], 512
    $region17: #{tpu_custom_call.1} parent=1 // pred_fallthru
      _
    %vm29 = vcmask 7168
    %30 = vst.msk [vmem:[#allocation2] sm:$0xff] %vm29, 0.0
    %31 = vst.msk [vmem:[#allocation2 + $0x10] sm:$0xff] %vm29, 0.0
    %v32 = vld [vmem:[%s0] sm:$0xff]
    %v33 = vld [vmem:[%s0 + $0x8] sm:$0xff]
    %36 = vrot.lane.b32.xlu0 %v32, 1
    %v37 = vpop.permute.xlu0 %36
    %38 = vrot.lane.b32.xlu0 %v33, 1
    %v39 = vpop.permute.xlu0 %38
    %vm42 = vcmask 1047560
    %43 = vst.msk [vmem:[#allocation2] sm:$0xff] %vm42, %v37
    %44 = vst.msk [vmem:[#allocation2 + $0x10] sm:$0xff] %vm42, %v39
    %v45 = vld [vmem:[%s0] sm:$0xff]
    %v46 = vld [vmem:[%s0 + $0x8] sm:$0xff]
    %47 = vst [vmem:[#allocation2 + $0x20] sm:$0xff] %v45
    %48 = vst [vmem:[#allocation2 + $0x30] sm:$0xff] %v46
    %vm49 = vcmask 1048568
    %50 = vst.msk [vmem:[#allocation2 + $0x40] sm:$0xff] %vm49, 0.0
    %51 = vst.msk [vmem:[#allocation2 + $0x50] sm:$0xff] %vm49, 0.0
    %v52 = vld [vmem:[%s0] sm:$0xff]
    %v53 = vld [vmem:[%s0 + $0x8] sm:$0xff]
    %56 = vrot.lane.b32.xlu0 %v52, 127
    %v57 = vpop.permute.xlu0 %56
    %58 = vrot.lane.b32.xlu0 %v53, 127
    %v59 = vpop.permute.xlu0 %58
    %vm62 = vcmask 1039360
    %63 = vst.msk [vmem:[#allocation2 + $0x40] sm:$0xff] %vm62, %v57
    %64 = vst.msk [vmem:[#allocation2 + $0x50] sm:$0xff] %vm62, %v59
    %65 = vst.msk [vmem:[#allocation2 + $0x8] sm:$0xff] %vm29, 0.0
    %66 = vst.msk [vmem:[#allocation2 + $0x18] sm:$0xff] %vm29, 0.0
    %s67 = scalar_lea.vmem %s0, 16
    %v68 = vld [vmem:[%s67] sm:$0xff]
    %v69 = vld [vmem:[%s67 + $0x8] sm:$0xff]
    %72 = vrot.lane.b32.xlu0 %v68, 1
    %v73 = vpop.permute.xlu0 %72
    %74 = vrot.lane.b32.xlu0 %v69, 1
    %v75 = vpop.permute.xlu0 %74
    %78 = vst.msk [vmem:[#allocation2 + $0x8] sm:$0xff] %vm42, %v73
    %79 = vst.msk [vmem:[#allocation2 + $0x18] sm:$0xff] %vm42, %v75
    %v80 = vld [vmem:[%s67] sm:$0xff]
    %v81 = vld [vmem:[%s67 + $0x8] sm:$0xff]
    %82 = vst [vmem:[#allocation2 + $0x28] sm:$0xff] %v80
    %83 = vst [vmem:[#allocation2 + $0x38] sm:$0xff] %v81
    %84 = vst.msk [vmem:[#allocation2 + $0x48] sm:$0xff] %vm49, 0.0
    %85 = vst.msk [vmem:[#allocation2 + $0x58] sm:$0xff] %vm49, 0.0
    %v86 = vld [vmem:[%s67] sm:$0xff]
    %v87 = vld [vmem:[%s67 + $0x8] sm:$0xff]
    %90 = vrot.lane.b32.xlu0 %v86, 127
    %v91 = vpop.permute.xlu0 %90
    %92 = vrot.lane.b32.xlu0 %v87, 127
    %v93 = vpop.permute.xlu0 %92
    %96 = vst.msk [vmem:[#allocation2 + $0x48] sm:$0xff] %vm62, %v91
    %97 = vst.msk [vmem:[#allocation2 + $0x58] sm:$0xff] %vm62, %v93
    %v98 = vld [vmem:[#allocation3] sm:$0xff]
    %v99 = vld [vmem:[#allocation3 + $0x8] sm:$0xff]
    %v100 = vld [vmem:[#allocation3 + $0x10] sm:$0xff]
    %v101 = vld [vmem:[#allocation3 + $0x18] sm:$0xff]
    %v102 = vld [vmem:[#allocation2] sm:$0xff]
    %v103 = vld [vmem:[#allocation2 + $0x8] sm:$0xff]
    %v104 = vld [vmem:[#allocation2 + $0x10] sm:$0xff]
    %v105 = vld [vmem:[#allocation2 + $0x18] sm:$0xff]
    %v106 = vld [vmem:[#allocation2 + $0x20] sm:$0xff]
    %v107 = vld [vmem:[#allocation2 + $0x28] sm:$0xff]
    %v108 = vld [vmem:[#allocation2 + $0x30] sm:$0xff]
    %v109 = vld [vmem:[#allocation2 + $0x38] sm:$0xff]
    %v110 = vld [vmem:[#allocation2 + $0x40] sm:$0xff]
    %v111 = vld [vmem:[#allocation2 + $0x48] sm:$0xff]
    %v112 = vld [vmem:[#allocation2 + $0x50] sm:$0xff]
    %v113 = vld [vmem:[#allocation2 + $0x58] sm:$0xff]
    %v114 = vld [vmem:[%s2] sm:$0xff]
    %v115 = vld [vmem:[%s2 + $0x8] sm:$0xff]
    %v116 = vld [vmem:[%s2 + $0x10] sm:$0xff]
    %v117 = vld [vmem:[%s2 + $0x18] sm:$0xff]
    %119 = vset.pattern.permute.xlu0 0
    %120 = vperm.xlu0 %119, %v114
    %v121 = vpop.permute.xlu0 %120
    %124 = vset.pattern.permute.xlu0 0
    %125 = vperm.xlu0 %124, %v115
    %v126 = vpop.permute.xlu0 %125
    %129 = vset.pattern.permute.xlu0 0
    %130 = vperm.xlu0 %129, %v116
    %v131 = vpop.permute.xlu0 %130
    %134 = vset.pattern.permute.xlu0 0
    %135 = vperm.xlu0 %134, %v117
    %v136 = vpop.permute.xlu0 %135
    %vm138 = vcmask 392192
    %v140 = vsel %vm138, %v98, 0
    %v143 = vsel %vm138, %v99, 0
    %v146 = vsel %vm138, %v100, 0
    %v149 = vsel %vm138, %v101, 0
    %151 = vmatprep.subr.mxu0 %v103
    %152 = vmatpush1.msra.mxu0 %v102
    %153 = vmatprep.subr.mxu0 %v105
    %154 = vmatpush1.msra.mxu0 %v104
    %155 = vmatprep.subr.mxu0 %v107
    %156 = vmatpush1.msra.mxu0 %v106
    %157 = vmatprep.subr.mxu0 %v109
    %158 = vmatpush1.msra.mxu0 %v108
    %159 = vmatprep.subr.mxu0 %v111
    %160 = vmatpush1.msra.mxu0 %v110
    %161 = vmatprep.subr.mxu0 %v113
    %162 = vmatpush1.msra.mxu0 %v112
    %163 = vmatprep.subr.mxu0 0.0
    %164 = vmatpush1.msra.mxu0 0.0
    %165 = vmatprep.subr.mxu0 0.0
    %166 = vmatpush1.msra.mxu0 0.0
    %167 = vmatprep.subr.mxu0 0.0
    %168 = vmatpush1.msra.mxu0 0.0
    %169 = vmatprep.subr.mxu0 0.0
    %170 = vmatpush1.msra.mxu0 0.0
    %171 = vmatprep.subr.mxu0 0.0
    %172 = vmatpush1.msra.mxu0 0.0
    %173 = vmatprep.subr.mxu0 0.0
    %174 = vmatpush1.msra.mxu0 0.0
    %175 = vmatprep.subr.mxu0 0.0
    %176 = vmatpush1.msra.mxu0 0.0
    %177 = vmatprep.subr.mxu0 0.0
    %178 = vmatpush1.msra.mxu0 0.0
    %179 = vmatprep.subr.mxu0 0.0
    %180 = vmatpush1.msra.mxu0 0.0
    %181 = vmatprep.subr.mxu0 0.0
    %182 = vmatpush1.msra.mxu0 0.0
    %183 = vmatprep.subr.mxu0 0.0
    %184 = vmatpush1.msra.mxu0 0.0
    %185 = vmatprep.subr.mxu0 0.0
    %186 = vmatpush1.msra.mxu0 0.0
    %187 = vmatprep.subr.mxu0 0.0
    %188 = vmatpush1.msra.mxu0 0.0
    %189 = vmatprep.subr.mxu0 0.0
    %190 = vmatpush1.msra.mxu0 0.0
    %191 = vmatprep.subr.mxu0 0.0
    %192 = vmatpush1.msra.mxu0 0.0
    %193 = vmatprep.subr.mxu0 0.0
    %194 = vmatpush1.msra.mxu0 0.0
    %195 = vmatprep.subr.mxu0 0.0
    %196 = vmatpush1.msra.mxu0 0.0
    %197 = vmatprep.subr.mxu0 0.0
    %198 = vmatpush1.msra.mxu0 0.0
    %199 = vmatprep.subr.mxu0 0.0
    %200 = vmatpush1.msra.mxu0 0.0
    %201 = vmatprep.subr.mxu0 0.0
    %202 = vmatpush1.msra.mxu0 0.0
    %203 = vmatprep.subr.mxu0 0.0
    %204 = vmatpush1.msra.mxu0 0.0
    %205 = vmatprep.subr.mxu0 0.0
    %206 = vmatpush1.msra.mxu0 0.0
    %207 = vmatprep.subr.mxu0 0.0
    %208 = vmatpush1.msra.mxu0 0.0
    %209 = vmatprep.subr.mxu0 0.0
    %210 = vmatpush1.msra.mxu0 0.0
    %211 = vmatprep.subr.mxu0 0.0
    %212 = vmatpush1.msra.mxu0 0.0
    %213 = vmatprep.subr.mxu0 0.0
    %214 = vmatpush1.msra.mxu0 0.0
    %215 = vmatprep.mubr.f32.mxu0 0.0
    %216 = vmatmul.mubr.f32.gmra.mrb[0].mxu0 %v140
    %v217 = vpop.f32.mrb[0].mxu0
    %v218 = vadd.f32 %v121, %v217
    %v219 = vpop.f32.mrb[0].mxu0
    %v220 = vadd.f32 %v121, %v219
    %221 = vmatprep.mubr.f32.mxu0 0.0
    %222 = vmatmul.mubr.f32.gmra.mrb[0].mxu0 %v143
    %v223 = vpop.f32.mrb[0].mxu0
    %v224 = vadd.f32 %v126, %v223
    %v225 = vpop.f32.mrb[0].mxu0
    %v226 = vadd.f32 %v126, %v225
    %227 = vmatprep.mubr.f32.mxu0 0.0
    %228 = vmatmul.mubr.f32.gmra.mrb[0].mxu0 %v146
    %v229 = vpop.f32.mrb[0].mxu0
    %v230 = vadd.f32 %v131, %v229
    %v231 = vpop.f32.mrb[0].mxu0
    %v232 = vadd.f32 %v131, %v231
    %233 = vmatprep.mubr.f32.mxu0 0.0
    %234 = vmatmul.mubr.f32.gmra.mrb[0].mxu0 %v149
    %v235 = vpop.f32.mrb[0].mxu0
    %v236 = vadd.f32 %v136, %v235
    %v237 = vpop.f32.mrb[0].mxu0
    %v238 = vadd.f32 %v136, %v237
    %239 = vdwg.mxu0
    %240 = vst [vmem:[#allocation6] sm:$0xff] %v218
    %241 = vst [vmem:[#allocation6 + $0x8] sm:$0xff] %v224
    %242 = vst [vmem:[#allocation6 + $0x10] sm:$0xff] %v230
    %243 = vst [vmem:[#allocation6 + $0x18] sm:$0xff] %v236
    %s244 = scalar_lea.vmem [#allocation6], 32
    %245 = vst [vmem:[%s244] sm:$0xff] %v220
    %246 = vst [vmem:[%s244 + $0x8] sm:$0xff] %v226
    %247 = vst [vmem:[%s244 + $0x10] sm:$0xff] %v232
    %248 = vst [vmem:[%s244 + $0x18] sm:$0xff] %v238
    // Predicated region
    $region18: #{tpu_custom_call.1} parent=1 // pred_check
      _
    $region19: #{tpu_custom_call.1} parent=1 // pred_check_branch
      %250 = sbr.rel (0) target = $region21
    $region20: #{tpu_custom_call.1} parent=1 // pred_region
      %s252 = ssub.s32 1024, 1024
      %253 = vsyncadd [#allocation5], %s252
      %s254 = sshll.u32 [#allocation6], 4
      %s255 = int_to_ptr.vmem [resolvable:$true] %s254
      %260 = dma.vmem_to_hbm [thread:$0]  %s255, 1024, %s3, [#allocation5], 128, 128, 8
    $region21: #{tpu_custom_call.1} parent=1 // pred_fallthru
      _
    // Predicated region
    $region22: #{tpu_custom_call.1} parent=1 // pred_check
      _
    $region23: #{tpu_custom_call.1} parent=1 // pred_check_branch
      %262 = sbr.rel (0) target = $region25
    $region24: #{tpu_custom_call.1} parent=1 // pred_region
      %263 = dma.done [#allocation5], 1024
    $region25: #{tpu_custom_call.1} parent=1 // pred_fallthru
      _
    %264 = vsyncpa [#allocation4], 1
    %265 = vsyncpa [#allocation5], 1

</llo_original>
